<compile_context>
chip_gen: v5e
topology: v5e:2x2
jax: 0.10.0
libtpu: 0.0.40
codegen_flags: <defaults>
</compile_context>

<pallas_src>
import jax
import jax.numpy as jnp
from jax.experimental import pallas as pl
from jax.experimental.pallas import tpu as pltpu


def _round_up(n, m):
    return ((n + m - 1) // m) * m


def _vmem_limit_bytes():
    """Generation-aware scoped-VMEM limit with headroom below capacity."""
    cap = 128 << 20                                   # v5e/v6e default
    try:
        cap = int(pltpu.get_tpu_info().vmem_capacity_bytes)
    except Exception:
        pass
    # ~75% of physical VMEM: ~96 MiB on 128 MiB parts, ~48 MiB on v7x (64 MiB).
    return min((cap * 3) // 4, 112 << 20)


def glu_kernel(x_ref, w12_ref, b12_ref, w3_ref, b3_ref, o_ref):
    # Fused gate/value projection: one MXU pass over x, one bias add.
    # Matmul operands in the weight dtype (bf16 fast path), f32 accumulation.
    x = x_ref[...].astype(w12_ref.dtype)                                  # [tm, D1]
    o12 = jnp.dot(x, w12_ref[...],
                  preferred_element_type=jnp.float32) + b12_ref[...]      # f32 [tm, 2*D2]
    D2 = o12.shape[1] // 2                                                # lane-aligned split
    o1 = o12[:, :D2]
    o2 = o12[:, D2:]
    # silu + gating stay in f32 (EUP sigmoid; no bf16 VALU on v5e).
    h = (o1 * jax.nn.sigmoid(o1)) * o2                                    # f32 [tm, D2]
    out = jnp.dot(h.astype(w3_ref.dtype), w3_ref[...],
                  preferred_element_type=jnp.float32) + b3_ref[...]       # f32 [tm, D1]
    # fina_act = 'None' -> identity; dropout p=0.0 -> no-op.
    o_ref[...] = out.astype(o_ref.dtype)


def prepare_glu_params(params, *, weight_dtype=jnp.bfloat16):
    """Fuse + pad the GLU weights ONCE (not per forward call).

    Zero padding is exact for this module: padded x columns / weight rows
    contribute 0, padded hidden columns are silu(0)*0 = 0 through W3, and
    padded output columns are sliced off.
    """
    w1, b1, w2, b2, w3, b3 = params
    d1, d2 = w1.shape
    D1 = _round_up(d1, 128)
    D2 = _round_up(d2, 128)
    wdt = weight_dtype

    w12 = jnp.zeros((D1, 2 * D2), wdt)
    w12 = (w12.at[:d1, :d2].set(w1.astype(wdt))
               .at[:d1, D2:D2 + d2].set(w2.astype(wdt)))
    b12 = jnp.zeros((1, 2 * D2), jnp.float32)
    b12 = (b12.at[:, :d2].set(b1.astype(jnp.float32))
                .at[:, D2:D2 + d2].set(b2.astype(jnp.float32)))
    w3p = jnp.zeros((D2, D1), wdt).at[:d2, :d1].set(w3.astype(wdt))
    b3p = jnp.zeros((1, D1), jnp.float32).at[:, :d1].set(b3.astype(jnp.float32))
    return dict(w12=w12, b12=b12, w3=w3p, b3=b3p, d1=d1, d2=d2, D1=D1, D2=D2)


def glu_forward(x, prepared, *, tm_max=512):
    """x: [rows, d1] -> [rows, d1] using pre-fused/padded params."""
    w12, b12, w3p, b3p = prepared["w12"], prepared["b12"], prepared["w3"], prepared["b3"]
    d1, D1, D2 = prepared["d1"], prepared["D1"], prepared["D2"]
    rows = x.shape[0]
    assert x.shape[1] == d1, "feature dim mismatch with prepared params"

    dt = x.dtype
    x_bytes = jnp.dtype(dt).itemsize
    w_bytes = jnp.dtype(w12.dtype).itemsize
    vmem_limit = _vmem_limit_bytes()

    # ---- row tiling (bounded padding, VMEM-budgeted, >=2 steps for v7x) ----
    rows8 = _round_up(rows, 8)
    weight_bytes = (w12.size + w3p.size) * w_bytes + (b12.size + b3p.size) * 4
    # per-row live bytes: x/out tiles (double-buffered) + f32 intermediates.
    per_row = 4 * D1 * x_bytes + (2 * D1 + 4 * D2) * 4
    budget = max(vmem_limit - 2 * weight_bytes - (8 << 20), 1 << 20)
    tm_hi = _round_up(max(tm_max, 8), 8)
    if vmem_limit <= (48 << 20):          # v7x-sized VMEM: keep tiles modest
        tm_hi = min(tm_hi, 256)
    tm_cap = max(8, min(tm_hi, (budget // per_row) // 8 * 8))
    ntiles = pl.cdiv(rows8, tm_cap)
    if ntiles == 1 and rows8 >= 16:
        ntiles = 2                        # keep both v7x TensorCores busy
    tm = _round_up(pl.cdiv(rows8, ntiles), 8)
    rows_p = tm * ntiles                  # wasted rows stay small (no ~2x blowup)

    # ---- pad x only when needed (no-pad fast path) -------------------------
    need_pad = (rows_p != rows) or (D1 != d1)
    if need_pad:
        x_p = jnp.zeros((rows_p, D1), dt).at[:rows, :d1].set(x)
    else:
        x_p = x

    # Grid-constant weight operands: single-buffer them only when they are
    # large enough for double-buffering to matter for VMEM (v7x residency).
    single_buffer = weight_bytes > (4 << 20)

    def const_spec(shape):
        if single_buffer:
            return pl.BlockSpec(shape, lambda i: (0, 0),
                                pipeline_mode=pl.Buffered(1))
        return pl.BlockSpec(shape, lambda i: (0, 0))

    out_p = pl.pallas_call(
        glu_kernel,
        out_shape=jax.ShapeDtypeStruct((rows_p, D1), dt),
        grid_spec=pltpu.PrefetchScalarGridSpec(
            num_scalar_prefetch=0,
            grid=(ntiles,),
            in_specs=[
                pl.BlockSpec((tm, D1), lambda i: (i, 0)),   # x row tile
                const_spec((D1, 2 * D2)),                   # fused W1|W2 (bf16)
                const_spec((1, 2 * D2)),                    # fused b1|b2 (f32)
                const_spec((D2, D1)),                       # W3 (bf16)
                const_spec((1, D1)),                        # b3 (f32)
            ],
            out_specs=pl.BlockSpec((tm, D1), lambda i: (i, 0)),
        ),
        compiler_params=pltpu.CompilerParams(
            dimension_semantics=("parallel",),
            vmem_limit_bytes=vmem_limit,
        ),
    )(x_p, w12, b12, w3p, b3p)

    if need_pad:
        return out_p[:rows, :d1]
    return out_p


def init_glu_params(key, d1, d2, dtype=jnp.float32):
    """Deterministic synthetic parameters (Kaiming-uniform-ish like nn.Linear)."""
    ks = jax.random.split(key, 6)
    lim1 = 1.0 / (d1 ** 0.5)
    lim3 = 1.0 / (d2 ** 0.5)
    w1 = jax.random.uniform(ks[0], (d1, d2), dtype, -lim1, lim1)
    b1 = jax.random.uniform(ks[1], (1, d2), dtype, -lim1, lim1)
    w2 = jax.random.uniform(ks[2], (d1, d2), dtype, -lim1, lim1)
    b2 = jax.random.uniform(ks[3], (1, d2), dtype, -lim1, lim1)
    w3 = jax.random.uniform(ks[4], (d2, d1), dtype, -lim3, lim3)
    b3 = jax.random.uniform(ks[5], (1, d1), dtype, -lim3, lim3)
    return (w1, b1, w2, b2, w3, b3)


def glu_reference(x, params):
    """Plain-JAX f32 reference for correctness."""
    w1, b1, w2, b2, w3, b3 = params
    o1 = x @ w1 + b1
    gate = o1 * jax.nn.sigmoid(o1)
    o2 = x @ w2 + b2
    return (gate * o2) @ w3 + b3


if __name__ == "__main__":
    key = jax.random.PRNGKey(0)
    k_x, k_p = jax.random.split(key)

    batch, seq, d1, d2 = 2, 8, 32, 64
    x = jax.random.normal(k_x, (batch, seq, d1), jnp.float32)
    params = init_glu_params(k_p, d1, d2)

    x2d = x.reshape(batch * seq, d1)                 # flatten leading dims
    ref = glu_reference(x2d, params).reshape(batch, seq, d1)

    # f32-weight path: tight check against the reference.
    prep_f32 = prepare_glu_params(params, weight_dtype=jnp.float32)
    out_f32 = glu_forward(x2d, prep_f32).reshape(batch, seq, d1)
    out_f32 = jax.block_until_ready(out_f32)
    assert out_f32.shape == (batch, seq, d1)
    assert jnp.allclose(out_f32, ref, atol=1e-5, rtol=1e-5)

    # bf16-weight fast path (default): bf16 MXU operands, f32 accumulation.
    prep_bf16 = prepare_glu_params(params)           # bfloat16 weights
    out_bf16 = glu_forward(x2d, prep_bf16).reshape(batch, seq, d1)
    out_bf16 = jax.block_until_ready(out_bf16)
    assert out_bf16.shape == (batch, seq, d1)
    assert jnp.allclose(out_bf16, ref, atol=3e-2, rtol=3e-2)

    print("KERNEL_OK")
</pallas_src>

<mosaic_0001>
module attributes {stable_mosaic.version = 11 : i64} {
  func.func @glu_kernel(%arg0: i32, %arg1: memref<8x128xf32, #tpu.memory_space<vmem>>, %arg2: memref<128x256xf32, #tpu.memory_space<vmem>>, %arg3: memref<1x256xf32, #tpu.memory_space<vmem>>, %arg4: memref<128x128xf32, #tpu.memory_space<vmem>>, %arg5: memref<1x128xf32, #tpu.memory_space<vmem>>, %arg6: memref<8x128xf32, #tpu.memory_space<vmem>>) attributes {dimension_semantics = [#tpu.dimension_semantics<parallel>], iteration_bounds = array<i64: 2>, scalar_prefetch = 0 : i64, scratch_operands = 0 : i64, tpu.core_type = #tpu.core_type<tc>, window_params = [{transform_indices = @transform_0, window_bounds = array<i64: 8, 128>}, {pipeline_mode = #tpu.pipeline_mode<synchronous>, transform_indices = @transform_1, window_bounds = array<i64: 128, 256>}, {pipeline_mode = #tpu.pipeline_mode<synchronous>, transform_indices = @transform_2, window_bounds = array<i64: 1, 256>}, {pipeline_mode = #tpu.pipeline_mode<synchronous>, transform_indices = @transform_3, window_bounds = array<i64: 128, 128>}, {pipeline_mode = #tpu.pipeline_mode<synchronous>, transform_indices = @transform_4, window_bounds = array<i64: 1, 128>}, {transform_indices = @transform_5, window_bounds = array<i64: 8, 128>}]} {
    %c0 = arith.constant 0 : index
    %c0_0 = arith.constant 0 : index
    %0 = vector.load %arg1[%c0, %c0_0] : memref<8x128xf32, #tpu.memory_space<vmem>>, vector<8x128xf32>
    %c0_1 = arith.constant 0 : index
    %c0_2 = arith.constant 0 : index
    %1 = vector.load %arg2[%c0_1, %c0_2] : memref<128x256xf32, #tpu.memory_space<vmem>>, vector<128x256xf32>
    %cst = arith.constant dense<0.000000e+00> : vector<8x256xf32>
    %2 = tpu.matmul %0, %1, %cst {dimension_numbers = #tpu.dot_dimension_numbers<[1], [0], [0], [1], [0, 0, 1, 1], [], []>} : vector<8x128xf32>, vector<128x256xf32>, vector<8x256xf32> -> vector<8x256xf32>
    %c0_3 = arith.constant 0 : index
    %c0_4 = arith.constant 0 : index
    %3 = vector.load %arg3[%c0_3, %c0_4] : memref<1x256xf32, #tpu.memory_space<vmem>>, vector<1x256xf32>
    %4 = vector.broadcast %3 : vector<1x256xf32> to vector<8x256xf32>
    %5 = arith.addf %2, %4 : vector<8x256xf32>
    %6 = vector.extract_strided_slice %5 {offsets = [0, 0], sizes = [8, 128], strides = [1, 1]} : vector<8x256xf32> to vector<8x128xf32>
    %7 = vector.extract_strided_slice %5 {offsets = [0, 128], sizes = [8, 128], strides = [1, 1]} : vector<8x256xf32> to vector<8x128xf32>
    %8 = arith.negf %6 : vector<8x128xf32>
    %9 = math.exp %8 : vector<8x128xf32>
    %cst_5 = arith.constant 1.000000e+00 : f32
    %10 = vector.broadcast %cst_5 : f32 to vector<8x128xf32>
    %11 = arith.addf %10, %9 : vector<8x128xf32>
    %12 = arith.divf %10, %11 : vector<8x128xf32>
    %13 = arith.mulf %6, %12 : vector<8x128xf32>
    %14 = arith.mulf %13, %7 : vector<8x128xf32>
    %c0_6 = arith.constant 0 : index
    %c0_7 = arith.constant 0 : index
    %15 = vector.load %arg4[%c0_6, %c0_7] : memref<128x128xf32, #tpu.memory_space<vmem>>, vector<128x128xf32>
    %cst_8 = arith.constant dense<0.000000e+00> : vector<8x128xf32>
    %16 = tpu.matmul %14, %15, %cst_8 {dimension_numbers = #tpu.dot_dimension_numbers<[1], [0], [0], [1], [0, 0, 1, 1], [], []>} : vector<8x128xf32>, vector<128x128xf32>, vector<8x128xf32> -> vector<8x128xf32>
    %c0_9 = arith.constant 0 : index
    %c0_10 = arith.constant 0 : index
    %17 = vector.load %arg5[%c0_9, %c0_10] : memref<1x128xf32, #tpu.memory_space<vmem>>, vector<1x128xf32>
    %18 = vector.broadcast %17 : vector<1x128xf32> to vector<8x128xf32>
    %19 = arith.addf %16, %18 : vector<8x128xf32>
    %c0_11 = arith.constant 0 : index
    %c0_12 = arith.constant 0 : index
    %20 = vector.load %arg6[%c0_11, %c0_12] : memref<8x128xf32, #tpu.memory_space<vmem>>, vector<8x128xf32>
    tpu.vector_store %arg6[%c0_11, %c0_12], %19 {strides = array<i32>} : memref<8x128xf32, #tpu.memory_space<vmem>>, vector<8x128xf32>,
    return
  }
  func.func @transform_0(%arg0: i32) -> (i32, i32) {
    %c0_i32 = arith.constant 0 : i32
    %c0_i32_0 = arith.constant 0 : i32
    return %arg0, %c0_i32 : i32, i32
  }
  func.func @transform_1(%arg0: i32) -> (i32, i32) {
    %c0_i32 = arith.constant 0 : i32
    %c0_i32_0 = arith.constant 0 : i32
    %c0_i32_1 = arith.constant 0 : i32
    return %c0_i32, %c0_i32_0 : i32, i32
  }
  func.func @transform_2(%arg0: i32) -> (i32, i32) {
    %c0_i32 = arith.constant 0 : i32
    %c0_i32_0 = arith.constant 0 : i32
    %c0_i32_1 = arith.constant 0 : i32
    return %c0_i32, %c0_i32_0 : i32, i32
  }
  func.func @transform_3(%arg0: i32) -> (i32, i32) {
    %c0_i32 = arith.constant 0 : i32
    %c0_i32_0 = arith.constant 0 : i32
    %c0_i32_1 = arith.constant 0 : i32
    return %c0_i32, %c0_i32_0 : i32, i32
  }
  func.func @transform_4(%arg0: i32) -> (i32, i32) {
    %c0_i32 = arith.constant 0 : i32
    %c0_i32_0 = arith.constant 0 : i32
    %c0_i32_1 = arith.constant 0 : i32
    return %c0_i32, %c0_i32_0 : i32, i32
  }
  func.func @transform_5(%arg0: i32) -> (i32, i32) {
    %c0_i32 = arith.constant 0 : i32
    %c0_i32_0 = arith.constant 0 : i32
    return %arg0, %c0_i32 : i32, i32
  }
}

</mosaic_0001>

<llo_original>
// kernel: tpu_custom_call.1
$region0: #{tpu_custom_call.1}
  #allocation0 [shape = 'u32[]', space=smem, size = 0x4, offset = 0x4, fixed_abs, tag = 'smem constant byte address 0x4 - core index']
  #allocation1 [shape = 'u32[72,128]{1,0:T(1,128)}', space=vmem, size = 0x9000, scoped, tag = 'internal scratch']
  %s0 = inlined_call_operand.hbm [shape: f32[16,128], index: 0, kind: input, shape index: {}]
  %s1 = inlined_call_operand.hbm [shape: f32[128,256], index: 1, kind: input, shape index: {}]
  %s2 = inlined_call_operand.hbm [shape: f32[1,256], index: 2, kind: input, shape index: {}]
  %s3 = inlined_call_operand.hbm [shape: f32[128,128], index: 3, kind: input, shape index: {}]
  %s4 = inlined_call_operand.vmem [shape: f32[1,128], index: 4, kind: input, shape index: {}]
  %s5 = inlined_call_operand.hbm [shape: f32[16,128], index: 5, kind: output, shape index: {}]
  %s6 = sld [smem:[#allocation0]]
  $region69: #{tpu_custom_call.1} parent=0
    _
  %s8 = ssub.s32 1, %s6
  %s9 = scalar_select 0, %s8, %s6
  $region1: #{tpu_custom_call.1} parent=0
    #allocation2 [shape = 'u8[8192]{0}', space=vmem, size = 0x2000, scoped, tag = 'input window, operand 0']
    #allocation3 [shape = 's32[2]{0}', space=sflag, size = 0x8, scoped, tag = 'scoped memory for tpu_custom_call.1']
    #allocation4 [shape = 's32[2]{0}', space=sflag, size = 0x8, scoped, tag = 'scoped memory for tpu_custom_call.1']
    #allocation5 [shape = 'u8[131072]{0}', space=vmem, size = 0x20000, scoped, tag = 'input window, operand 1, single buffered']
    #allocation6 [shape = 's32[1]{0}', space=sflag, size = 0x4, scoped, tag = 'scoped memory for tpu_custom_call.1']
    #allocation7 [shape = 'u8[1024]{0}', space=vmem, size = 0x400, scoped, tag = 'input window, operand 2, single buffered']
    #allocation8 [shape = 'u8[65536]{0}', space=vmem, size = 0x10000, scoped, tag = 'input window, operand 3, single buffered']
    #allocation9 [shape = 's32[1]{0}', space=sflag, size = 0x4, scoped, tag = 'scoped memory for tpu_custom_call.1']
    #allocation10 [shape = 'u8[8192]{0}', space=vmem, size = 0x2000, scoped, tag = 'output window, operand 0']
    %10 = vsyncpa [#allocation3], 0
    %s11 = scalar_lea.sflag [#allocation3], 1
    %12 = vsyncpa %s11, 0
    %13 = vsyncpa [#allocation6], 0
    %14 = vsyncpa [#allocation9], 0
    %15 = vsyncpa [#allocation4], 0
    %s16 = scalar_lea.sflag [#allocation4], 1
    %17 = vsyncpa %s16, 0
    loop: start=0, step=1, limit=4
    $region2: #{tpu_custom_call.1} parent=1 // loop_pre_header
      _
    $region3: #{tpu_custom_call.1} parent=1 // loop_header
      %s19 = sphi 0, %s23
      %p20 = scmp.ge.s32.totalorder %s19, 4
      %s29 = sphi 0, %s31
      %s32 = sphi 0, %s29
      %s33 = sphi 0, %s32
      %s49 = sphi 0, %s33
      %s53 = sphi 0, %s53
      %s55 = sphi 0, %s53
      %s56 = sphi 0, %s55
      %s70 = sphi 0, %s56
      %s74 = sphi 0, %s74
      %s76 = sphi 0, %s74
      %s77 = sphi 0, %s76
      %s91 = sphi 0, %s77
      %s95 = sphi 0, %s95
      %s97 = sphi 0, %s95
      %s98 = sphi 0, %s97
      %s112 = sphi 0, %s98
      %s116 = sphi 0, %s116
      %s118 = sphi 0, %s116
      %s119 = sphi 0, %s118
      %s133 = sphi 0, %s119
      %s139 = sphi 0, %s141
      %s142 = sphi 0, %s139
      %s143 = sphi 0, %s142
      %s159 = sphi 0, %s143
    $region4: #{tpu_custom_call.1} parent=1 // loop_header_branch
      %22 = sbr.rel (%p20) target = $region8
    $region5: #{tpu_custom_call.1} parent=1 // loop_body
      %s24 = ssub.s32 %s19, 1
      %s25 = ssub.s32 %s19, 2
      %s26 = sadd.s32 %s19, 1
      %s27 = ssub.s32 %s19, %s26
      %p28 = scmp.eq.s32.totalorder %s27, 0
      %s30 = sadd.s32 %s29, 1
      %s31 = scalar_select %p28, %s29, %s30
      %p34 = pneg %p28
      %p35 = scmp.eq.s32.totalorder %s19, 1
      %p36 = por %p34, %p35
      %p37 = scmp.ne.s32.totalorder %s29, %s32
      %p38 = scmp.eq.s32.totalorder %s19, 0
      %p39 = por %p37, %p38
      %p40 = scmp.ne.s32.totalorder %s29, %s32
      %p41 = scmp.eq.s32.totalorder %s24, 1
      %p42 = por %p40, %p41
      %p43 = scmp.ne.s32.totalorder %s32, %s33
      %p44 = scmp.eq.s32.totalorder %s24, 0
      %p45 = por %p43, %p44
      %p46 = scmp.ne.s32.totalorder %s32, %s33
      %p47 = scmp.eq.s32.totalorder %s25, 1
      %p48 = por %p46, %p47
      %p50 = scmp.ne.s32.totalorder %s33, %s49
      %p51 = scmp.eq.s32.totalorder %s25, 0
      %p52 = por %p50, %p51
      %s54 = sadd.s32 %s53, 1
      %p57 = scmp.eq.s32.totalorder %s19, 1
      %p58 = scmp.ne.s32.totalorder %s53, %s55
      %p59 = scmp.eq.s32.totalorder %s19, 0
      %p60 = por %p58, %p59
      %p61 = scmp.ne.s32.totalorder %s53, %s55
      %p62 = scmp.eq.s32.totalorder %s24, 1
      %p63 = por %p61, %p62
      %p64 = scmp.ne.s32.totalorder %s55, %s56
      %p65 = scmp.eq.s32.totalorder %s24, 0
      %p66 = por %p64, %p65
      %p67 = scmp.ne.s32.totalorder %s55, %s56
      %p68 = scmp.eq.s32.totalorder %s25, 1
      %p69 = por %p67, %p68
      %p71 = scmp.ne.s32.totalorder %s56, %s70
      %p72 = scmp.eq.s32.totalorder %s25, 0
      %p73 = por %p71, %p72
      %s75 = sadd.s32 %s74, 1
      %p78 = scmp.eq.s32.totalorder %s19, 1
      %p79 = scmp.ne.s32.totalorder %s74, %s76
      %p80 = scmp.eq.s32.totalorder %s19, 0
      %p81 = por %p79, %p80
      %p82 = scmp.ne.s32.totalorder %s74, %s76
      %p83 = scmp.eq.s32.totalorder %s24, 1
      %p84 = por %p82, %p83
      %p85 = scmp.ne.s32.totalorder %s76, %s77
      %p86 = scmp.eq.s32.totalorder %s24, 0
      %p87 = por %p85, %p86
      %p88 = scmp.ne.s32.totalorder %s76, %s77
      %p89 = scmp.eq.s32.totalorder %s25, 1
      %p90 = por %p88, %p89
      %p92 = scmp.ne.s32.totalorder %s77, %s91
      %p93 = scmp.eq.s32.totalorder %s25, 0
      %p94 = por %p92, %p93
      %s96 = sadd.s32 %s95, 1
      %p99 = scmp.eq.s32.totalorder %s19, 1
      %p100 = scmp.ne.s32.totalorder %s95, %s97
      %p101 = scmp.eq.s32.totalorder %s19, 0
      %p102 = por %p100, %p101
      %p103 = scmp.ne.s32.totalorder %s95, %s97
      %p104 = scmp.eq.s32.totalorder %s24, 1
      %p105 = por %p103, %p104
      %p106 = scmp.ne.s32.totalorder %s97, %s98
      %p107 = scmp.eq.s32.totalorder %s24, 0
      %p108 = por %p106, %p107
      %p109 = scmp.ne.s32.totalorder %s97, %s98
      %p110 = scmp.eq.s32.totalorder %s25, 1
      %p111 = por %p109, %p110
      %p113 = scmp.ne.s32.totalorder %s98, %s112
      %p114 = scmp.eq.s32.totalorder %s25, 0
      %p115 = por %p113, %p114
      %s117 = sadd.s32 %s116, 1
      %p120 = scmp.eq.s32.totalorder %s19, 1
      %p121 = scmp.ne.s32.totalorder %s116, %s118
      %p122 = scmp.eq.s32.totalorder %s19, 0
      %p123 = por %p121, %p122
      %p124 = scmp.ne.s32.totalorder %s116, %s118
      %p125 = scmp.eq.s32.totalorder %s24, 1
      %p126 = por %p124, %p125
      %p127 = scmp.ne.s32.totalorder %s118, %s119
      %p128 = scmp.eq.s32.totalorder %s24, 0
      %p129 = por %p127, %p128
      %p130 = scmp.ne.s32.totalorder %s118, %s119
      %p131 = scmp.eq.s32.totalorder %s25, 1
      %p132 = por %p130, %p131
      %p134 = scmp.ne.s32.totalorder %s119, %s133
      %p135 = scmp.eq.s32.totalorder %s25, 0
      %p136 = por %p134, %p135
      %s137 = ssub.s32 %s19, %s26
      %p138 = scmp.eq.s32.totalorder %s137, 0
      %s140 = sadd.s32 %s139, 1
      %s141 = scalar_select %p138, %s139, %s140
      %p144 = pneg %p138
      %p145 = scmp.eq.s32.totalorder %s19, 1
      %p146 = por %p144, %p145
      %p147 = scmp.ne.s32.totalorder %s139, %s142
      %p148 = scmp.eq.s32.totalorder %s19, 0
      %p149 = por %p147, %p148
      %p150 = scmp.ne.s32.totalorder %s139, %s142
      %p151 = scmp.eq.s32.totalorder %s24, 1
      %p152 = por %p150, %p151
      %p153 = scmp.ne.s32.totalorder %s142, %s143
      %p154 = scmp.eq.s32.totalorder %s24, 0
      %p155 = por %p153, %p154
      %p156 = scmp.ne.s32.totalorder %s142, %s143
      %p157 = scmp.eq.s32.totalorder %s25, 1
      %p158 = por %p156, %p157
      %p160 = scmp.ne.s32.totalorder %s143, %s159
      %p161 = scmp.eq.s32.totalorder %s25, 0
      %p162 = por %p160, %p161
      %p163 = scmp.le.s32.totalorder 1, %s19
      %p164 = scmp.lt.s32.totalorder %s19, 3
      %p165 = pnand %p163, %p164
      %p166 = pneg %p165
      // Predicated region
      $region9: #{tpu_custom_call.1} parent=5 // pred_check
        _
      $region10: #{tpu_custom_call.1} parent=5 // pred_check_branch
        %168 = sbr.rel (%p165) target = $region12
      $region11: #{tpu_custom_call.1} parent=5 // pred_region
        %s169 = ssub.s32 %s19, 1
        // Predicated region
        $region13: #{tpu_custom_call.1} parent=11 // pred_check
          %p170 = pneg %p66
        $region14: #{tpu_custom_call.1} parent=11 // pred_check_branch
          %172 = sbr.rel (%p170) target = $region16
        $region15: #{tpu_custom_call.1} parent=11 // pred_region
          %174 = vsyncadd [#allocation6], 0
          %s175 = sshll.u32 %s1, 4
          %s176 = int_to_ptr.hbm [resolvable:$true] %s175
          %s177 = sshll.u32 [#allocation5], 4
          %s178 = int_to_ptr.vmem [resolvable:$true] %s177
          %183 = dma.hbm_to_vmem [thread:$0]  %s176, 4096, %s178, [#allocation6], 256, 256, 16
        $region16: #{tpu_custom_call.1} parent=11 // pred_fallthru
          _
        // Predicated region
        $region17: #{tpu_custom_call.1} parent=11 // pred_check
          %p184 = pneg %p87
        $region18: #{tpu_custom_call.1} parent=11 // pred_check_branch
          %186 = sbr.rel (%p184) target = $region20
        $region19: #{tpu_custom_call.1} parent=11 // pred_region
          %188 = vsyncadd [#allocation6], 0
          %s190 = sshll.u32 %s2, 4
          %s191 = int_to_ptr.hbm [resolvable:$true] %s190
          %s192 = sshll.u32 [#allocation7], 4
          %s193 = int_to_ptr.vmem [resolvable:$true] %s192
          %195 = dma.hbm_to_vmem [thread:$0]  %s191, 32, %s193, [#allocation6]
        $region20: #{tpu_custom_call.1} parent=11 // pred_fallthru
          _
        // Predicated region
        $region21: #{tpu_custom_call.1} parent=11 // pred_check
          %p196 = pneg %p108
        $region22: #{tpu_custom_call.1} parent=11 // pred_check_branch
          %198 = sbr.rel (%p196) target = $region24
        $region23: #{tpu_custom_call.1} parent=11 // pred_region
          %200 = vsyncadd [#allocation9], 0
          %s201 = sshll.u32 %s3, 4
          %s202 = int_to_ptr.hbm [resolvable:$true] %s201
          %s203 = sshll.u32 [#allocation8], 4
          %s204 = int_to_ptr.vmem [resolvable:$true] %s203
          %209 = dma.hbm_to_vmem [thread:$0]  %s202, 2048, %s204, [#allocation9], 128, 128, 8
        $region24: #{tpu_custom_call.1} parent=11 // pred_fallthru
          _
        // Predicated region
        $region25: #{tpu_custom_call.1} parent=11 // pred_check
          %p210 = pneg %p129
        $region26: #{tpu_custom_call.1} parent=11 // pred_check_branch
          %212 = sbr.rel (%p210) target = $region28
        $region27: #{tpu_custom_call.1} parent=11 // pred_region
          _
        $region28: #{tpu_custom_call.1} parent=11 // pred_fallthru
          _
      $region12: #{tpu_custom_call.1} parent=5 // pred_fallthru
        _
      %p213 = scmp.lt.s32.totalorder %s19, 2
      // Predicated region
      $region29: #{tpu_custom_call.1} parent=5 // pred_check
        %p214 = pneg %p213
      $region30: #{tpu_custom_call.1} parent=5 // pred_check_branch
        %216 = sbr.rel (%p214) target = $region32
      $region31: #{tpu_custom_call.1} parent=5 // pred_region
        // Predicated region
        $region33: #{tpu_custom_call.1} parent=31 // pred_check
          %p217 = pneg %p39
        $region34: #{tpu_custom_call.1} parent=31 // pred_check_branch
          %219 = sbr.rel (%p217) target = $region36
        $region35: #{tpu_custom_call.1} parent=31 // pred_region
          %s220 = sand.u32 %s29, 1
          %s221 = scalar_lea.sflag [#allocation3], %s220
          %s222 = sand.u32 %s29, 1
          %s223 = smul.addr %s222, 8
          %s224 = scalar_lea.vmem [#allocation2], %s223
          %226 = vsyncadd %s221, 0
          %s227 = smul.addr %s19, 8
          %s228 = scalar_lea.hbm %s0, %s227
          %s230 = sshll.u32 %s228, 4
          %s231 = int_to_ptr.hbm [resolvable:$true] %s230
          %s232 = sshll.u32 %s224, 4
          %s233 = int_to_ptr.vmem [resolvable:$true] %s232
          %235 = dma.hbm_to_vmem [thread:$0]  %s231, 128, %s233, %s221
        $region36: #{tpu_custom_call.1} parent=31 // pred_fallthru
          _
      $region32: #{tpu_custom_call.1} parent=5 // pred_fallthru
        _
      %p236 = scmp.le.s32.totalorder 1, %s19
      %p237 = scmp.lt.s32.totalorder %s19, 3
      %p238 = pnand %p236, %p237
      %p239 = pneg %p238
      // Predicated region
      $region37: #{tpu_custom_call.1} parent=5 // pred_check
        _
      $region38: #{tpu_custom_call.1} parent=5 // pred_check_branch
        %241 = sbr.rel (%p238) target = $region40
      $region39: #{tpu_custom_call.1} parent=5 // pred_region
        %s242 = ssub.s32 %s19, 1
        %s243 = sand.u32 %s32, 1
        %s244 = scalar_lea.sflag [#allocation3], %s243
        %s245 = sand.u32 %s32, 1
        %s246 = smul.addr %s245, 8
        %s247 = scalar_lea.vmem [#allocation2], %s246
        // Predicated region
        $region41: #{tpu_custom_call.1} parent=39 // pred_check
          %p248 = pneg %p45
        $region42: #{tpu_custom_call.1} parent=39 // pred_check_branch
          %250 = sbr.rel (%p248) target = $region44
        $region43: #{tpu_custom_call.1} parent=39 // pred_region
          %252 = dma.done %s244, 128
        $region44: #{tpu_custom_call.1} parent=39 // pred_fallthru
          _
        // Predicated region
        $region45: #{tpu_custom_call.1} parent=39 // pred_check
          %p253 = pneg %p66
        $region46: #{tpu_custom_call.1} parent=39 // pred_check_branch
          %255 = sbr.rel (%p253) target = $region48
        $region47: #{tpu_custom_call.1} parent=39 // pred_region
          %257 = dma.done [#allocation6], 4096
        $region48: #{tpu_custom_call.1} parent=39 // pred_fallthru
          _
        // Predicated region
        $region49: #{tpu_custom_call.1} parent=39 // pred_check
          %p258 = pneg %p87
        $region50: #{tpu_custom_call.1} parent=39 // pred_check_branch
          %260 = sbr.rel (%p258) target = $region52
        $region51: #{tpu_custom_call.1} parent=39 // pred_region
          %262 = dma.done [#allocation6], 32
        $region52: #{tpu_custom_call.1} parent=39 // pred_fallthru
          _
        // Predicated region
        $region53: #{tpu_custom_call.1} parent=39 // pred_check
          %p263 = pneg %p108
        $region54: #{tpu_custom_call.1} parent=39 // pred_check_branch
          %265 = sbr.rel (%p263) target = $region56
        $region55: #{tpu_custom_call.1} parent=39 // pred_region
          %267 = dma.done [#allocation9], 2048
        $region56: #{tpu_custom_call.1} parent=39 // pred_fallthru
          _
        %s268 = sand.u32 %s32, 1
        %s269 = scalar_lea.sflag [#allocation3], %s268
        %s270 = sand.u32 %s32, 1
        %s271 = smul.addr %s270, 8
        %s272 = scalar_lea.vmem [#allocation2], %s271
        %p273 = pneg %p45
        %p274 = pneg %p42
        %p275 = pneg %p66
        %p276 = pneg %p63
        %p277 = pneg %p87
        %p278 = pneg %p84
        %p279 = pneg %p108
        %p280 = pneg %p105
        %p281 = pneg %p129
        %p282 = pneg %p126
        %p283 = pneg %p155
        %p284 = pneg %p152
        %s285 = sand.u32 %s142, 1
        %s286 = scalar_lea.sflag [#allocation4], %s285
        %s287 = sand.u32 %s142, 1
        %s288 = smul.addr %s287, 8
        %s289 = scalar_lea.vmem [#allocation10], %s288
        %v290 = vld [vmem:[%s247] sm:$0xff]
        %v291 = vld [vmem:[#allocation5] sm:$0xff]
        %v292 = vld [vmem:[#allocation5 + $0x8] sm:$0xff]
        %v293 = vld [vmem:[#allocation5 + $0x10] sm:$0xff]
        %v294 = vld [vmem:[#allocation5 + $0x18] sm:$0xff]
        %v295 = vld [vmem:[#allocation5 + $0x20] sm:$0xff]
        %v296 = vld [vmem:[#allocation5 + $0x28] sm:$0xff]
        %v297 = vld [vmem:[#allocation5 + $0x30] sm:$0xff]
        %v298 = vld [vmem:[#allocation5 + $0x38] sm:$0xff]
        %v299 = vld [vmem:[#allocation5 + $0x40] sm:$0xff]
        %v300 = vld [vmem:[#allocation5 + $0x48] sm:$0xff]
        %v301 = vld [vmem:[#allocation5 + $0x50] sm:$0xff]
        %v302 = vld [vmem:[#allocation5 + $0x58] sm:$0xff]
        %v303 = vld [vmem:[#allocation5 + $0x60] sm:$0xff]
        %v304 = vld [vmem:[#allocation5 + $0x68] sm:$0xff]
        %v305 = vld [vmem:[#allocation5 + $0x70] sm:$0xff]
        %v306 = vld [vmem:[#allocation5 + $0x78] sm:$0xff]
        %v307 = vld [vmem:[#allocation5 + $0x80] sm:$0xff]
        %v308 = vld [vmem:[#allocation5 + $0x88] sm:$0xff]
        %v309 = vld [vmem:[#allocation5 + $0x90] sm:$0xff]
        %v310 = vld [vmem:[#allocation5 + $0x98] sm:$0xff]
        %v311 = vld [vmem:[#allocation5 + $0xa0] sm:$0xff]
        %v312 = vld [vmem:[#allocation5 + $0xa8] sm:$0xff]
        %v313 = vld [vmem:[#allocation5 + $0xb0] sm:$0xff]
        %v314 = vld [vmem:[#allocation5 + $0xb8] sm:$0xff]
        %v315 = vld [vmem:[#allocation5 + $0xc0] sm:$0xff]
        %v316 = vld [vmem:[#allocation5 + $0xc8] sm:$0xff]
        %v317 = vld [vmem:[#allocation5 + $0xd0] sm:$0xff]
        %v318 = vld [vmem:[#allocation5 + $0xd8] sm:$0xff]
        %v319 = vld [vmem:[#allocation5 + $0xe0] sm:$0xff]
        %v320 = vld [vmem:[#allocation5 + $0xe8] sm:$0xff]
        %v321 = vld [vmem:[#allocation5 + $0xf0] sm:$0xff]
        %v322 = vld [vmem:[#allocation5 + $0xf8] sm:$0xff]
        %v323 = vld [vmem:[#allocation7] sm:$0x3]
        %v325 = vperm.slane %v323, 0
        %v326 = vperm.slane %v323, 1
        %329 = vmatpush.msra.mxu0 %v321
        %330 = vmatpush.msra.mxu0 %v319
        %331 = vmatpush.msra.mxu0 %v317
        %332 = vmatpush.msra.mxu0 %v315
        %333 = vmatpush.msra.mxu0 %v313
        %334 = vmatpush.msra.mxu0 %v311
        %335 = vmatpush.msra.mxu0 %v309
        %336 = vmatpush.msra.mxu0 %v307
        %337 = vmatpush.msra.mxu0 %v305
        %338 = vmatpush.msra.mxu0 %v303
        %339 = vmatpush.msra.mxu0 %v301
        %340 = vmatpush.msra.mxu0 %v299
        %341 = vmatpush.msra.mxu0 %v297
        %342 = vmatpush.msra.mxu0 %v295
        %343 = vmatpush.msra.mxu0 %v293
        %344 = vmatpush.msra.mxu0 %v291
        %345 = vmatmul.f32.gmra.mxu0 %v290
        %v346 = vpop.f32.mrf.mxu0
        %v347 = vadd.f32 %v325, %v346
        %348 = vdwg.mxu0
        %349 = vmatpush.msra.mxu0 %v322
        %350 = vmatpush.msra.mxu0 %v320
        %351 = vmatpush.msra.mxu0 %v318
        %352 = vmatpush.msra.mxu0 %v316
        %353 = vmatpush.msra.mxu0 %v314
        %354 = vmatpush.msra.mxu0 %v312
        %355 = vmatpush.msra.mxu0 %v310
        %356 = vmatpush.msra.mxu0 %v308
        %357 = vmatpush.msra.mxu0 %v306
        %358 = vmatpush.msra.mxu0 %v304
        %359 = vmatpush.msra.mxu0 %v302
        %360 = vmatpush.msra.mxu0 %v300
        %361 = vmatpush.msra.mxu0 %v298
        %362 = vmatpush.msra.mxu0 %v296
        %363 = vmatpush.msra.mxu0 %v294
        %364 = vmatpush.msra.mxu0 %v292
        %365 = vmatmul.f32.gmra.mxu0 %v290
        %v366 = vpop.f32.mrf.mxu0
        %v367 = vadd.f32 %v326, %v366
        %368 = vdwg.mxu0
        %v369 = vxor.u32 %v347, 2147483648
        %v370 = vmul.f32 %v369, 1.442695
        %v371 = vpow.pop %v370
        %v372 = vadd.f32 %v371, 1.0
        %v373 = vrcp.pop %v372
        %v374 = vmul.f32 %v372, %v373
        %v375 = vsub.f32 1.0, %v374
        %v376 = vmul.f32 %v373, %v375
        %v377 = vadd.f32 %v373, %v376
        %vm378 = vweird.f32 %v372
        %vm379 = vweird.f32 %v373
        %vm380 = vmor %vm378, %vm379
        %v381 = vsel %vm380, %v373, %v377
        %v382 = vand.u32 2147483647, %v372
        %vm383 = vcmp.eq.f32.partialorder %v382, 8.507059e+37
        %v384 = vand.u32 %v372, 2147483648
        %v385 = vor.u32 1.1754944e-38, %v384
        %v386 = vsel %vm383, %v385, %v381
        %v387 = vmul.f32 1.0, %v386
        %v388 = vmul.f32 %v347, %v387
        %v389 = vmul.f32 %v388, %v367
        %v390 = vld [vmem:[#allocation8] sm:$0xff]
        %v391 = vld [vmem:[#allocation8 + $0x8] sm:$0xff]
        %v392 = vld [vmem:[#allocation8 + $0x10] sm:$0xff]
        %v393 = vld [vmem:[#allocation8 + $0x18] sm:$0xff]
        %v394 = vld [vmem:[#allocation8 + $0x20] sm:$0xff]
        %v395 = vld [vmem:[#allocation8 + $0x28] sm:$0xff]
        %v396 = vld [vmem:[#allocation8 + $0x30] sm:$0xff]
        %v397 = vld [vmem:[#allocation8 + $0x38] sm:$0xff]
        %v398 = vld [vmem:[#allocation8 + $0x40] sm:$0xff]
        %v399 = vld [vmem:[#allocation8 + $0x48] sm:$0xff]
        %v400 = vld [vmem:[#allocation8 + $0x50] sm:$0xff]
        %v401 = vld [vmem:[#allocation8 + $0x58] sm:$0xff]
        %v402 = vld [vmem:[#allocation8 + $0x60] sm:$0xff]
        %v403 = vld [vmem:[#allocation8 + $0x68] sm:$0xff]
        %v404 = vld [vmem:[#allocation8 + $0x70] sm:$0xff]
        %v405 = vld [vmem:[#allocation8 + $0x78] sm:$0xff]
        %v406 = vld [vmem:[%s4] sm:$0x1]
        %v408 = vperm.slane %v406, 0
        %410 = vmatpush.msra.mxu0 %v405
        %411 = vmatpush.msra.mxu0 %v404
        %412 = vmatpush.msra.mxu0 %v403
        %413 = vmatpush.msra.mxu0 %v402
        %414 = vmatpush.msra.mxu0 %v401
        %415 = vmatpush.msra.mxu0 %v400
        %416 = vmatpush.msra.mxu0 %v399
        %417 = vmatpush.msra.mxu0 %v398
        %418 = vmatpush.msra.mxu0 %v397
        %419 = vmatpush.msra.mxu0 %v396
        %420 = vmatpush.msra.mxu0 %v395
        %421 = vmatpush.msra.mxu0 %v394
        %422 = vmatpush.msra.mxu0 %v393
        %423 = vmatpush.msra.mxu0 %v392
        %424 = vmatpush.msra.mxu0 %v391
        %425 = vmatpush.msra.mxu0 %v390
        %426 = vmatmul.f32.gmra.mxu0 %v389
        %v427 = vpop.f32.mrf.mxu0
        %v428 = vadd.f32 %v408, %v427
        %429 = vdwg.mxu0
        %430 = vst [vmem:[%s289] sm:$0xff] %v428
        %s431 = sand.u32 %s142, 1
        %s432 = scalar_lea.sflag [#allocation4], %s431
        %s433 = sand.u32 %s142, 1
        %s434 = smul.addr %s433, 8
        %s435 = scalar_lea.vmem [#allocation10], %s434
        // Predicated region
        $region57: #{tpu_custom_call.1} parent=39 // pred_check
          %p436 = pneg %p152
        $region58: #{tpu_custom_call.1} parent=39 // pred_check_branch
          %438 = sbr.rel (%p436) target = $region60
        $region59: #{tpu_custom_call.1} parent=39 // pred_region
          %440 = vsyncadd %s432, 0
          %s441 = smul.addr %s24, 8
          %s442 = scalar_lea.hbm %s5, %s441
          %s444 = sshll.u32 %s435, 4
          %s445 = int_to_ptr.vmem [resolvable:$true] %s444
          %s446 = sshll.u32 %s442, 4
          %s447 = int_to_ptr.hbm [resolvable:$true] %s446
          %449 = dma.vmem_to_hbm [thread:$0]  %s445, 128, %s447, %s432
        $region60: #{tpu_custom_call.1} parent=39 // pred_fallthru
          _
      $region40: #{tpu_custom_call.1} parent=5 // pred_fallthru
        _
      %p450 = scmp.le.s32.totalorder 2, %s19
      // Predicated region
      $region61: #{tpu_custom_call.1} parent=5 // pred_check
        %p451 = pneg %p450
      $region62: #{tpu_custom_call.1} parent=5 // pred_check_branch
        %453 = sbr.rel (%p451) target = $region64
      $region63: #{tpu_custom_call.1} parent=5 // pred_region
        %s454 = ssub.s32 %s19, 2
        // Predicated region
        $region65: #{tpu_custom_call.1} parent=63 // pred_check
          %p455 = pneg %p158
        $region66: #{tpu_custom_call.1} parent=63 // pred_check_branch
          %457 = sbr.rel (%p455) target = $region68
        $region67: #{tpu_custom_call.1} parent=63 // pred_region
          %s458 = sand.u32 %s143, 1
          %s459 = scalar_lea.sflag [#allocation4], %s458
          %s460 = sand.u32 %s143, 1
          %s461 = smul.addr %s460, 8
          %s462 = scalar_lea.vmem [#allocation10], %s461
          %464 = dma.done %s459, 128
        $region68: #{tpu_custom_call.1} parent=63 // pred_fallthru
          _
      $region64: #{tpu_custom_call.1} parent=5 // pred_fallthru
        _
    $region6: #{tpu_custom_call.1} parent=1 // loop_footer
      %s23 = sadd.s32 1, %s19
    $region7: #{tpu_custom_call.1} parent=1 // loop_footer_branch
      %18 = sbr.rel target = $region3
    $region8: #{tpu_custom_call.1} parent=1 // loop_exit
      _
    %465 = vsyncpa [#allocation3], 1
    %s466 = scalar_lea.sflag [#allocation3], 1
    %467 = vsyncpa %s466, 1
    %468 = vsyncpa [#allocation6], 1
    %469 = vsyncpa [#allocation9], 1
    %470 = vsyncpa [#allocation4], 1
    %s471 = scalar_lea.sflag [#allocation4], 1
    %472 = vsyncpa %s471, 1

</llo_original>
